<compile_context>
chip_gen: v6e
topology: v6e:2x2x1
jax: 0.10.0
libtpu: 0.0.40
codegen_flags: <defaults>
</compile_context>

<pallas_src>
import math
import functools

import jax
import jax.numpy as jnp
from jax.experimental import pallas as pl
from jax.experimental.pallas import tpu as pltpu


# ----------------------------- sizing helpers --------------------------------

def _vmem_budget():
    """Generation-aware VMEM sizing (v5e/v6e: 128 MiB physical, v7x: 64 MiB)."""
    phys = 64 * 1024 * 1024  # conservative default (works on every generation)
    try:
        info = pltpu.get_tpu_info()
        phys = int(getattr(info, "vmem_capacity_bytes", phys)) or phys
    except Exception:
        pass
    limit = min((phys * 3) // 4, 96 * 1024 * 1024)   # scoped vmem limit
    budget = limit // 2                              # tile-sizing budget (headroom)
    return budget, limit


def _pick_pack(M, Cout, lane=128):
    """Largest g <= 128//Cout that divides M (lane-dense output packing factor)."""
    g_max = max(1, lane // max(Cout, 1))
    for cand in range(min(g_max, M), 0, -1):
        if M % cand == 0:
            return cand
    return 1


def _pick_tm(tm_req, Mp, Kp, Coutp, in_esize, out_esize, budget_bytes):
    """Largest row tile fitting the VMEM budget (weight/shift/x/out double-buffered
    plus one f32 matmul temporary), with >=2 grid tiles for large problems."""
    fixed = 2 * Kp * Coutp * in_esize + 2 * Coutp * 4
    per_row = 2 * Kp * in_esize + 2 * Coutp * out_esize + Coutp * 4
    avail = max(budget_bytes - fixed, 8 * per_row)
    tm = min(int(tm_req), avail // per_row)
    if Mp > 512:                      # make sure both v7x TensorCores get work
        tm = min(tm, -(-Mp // 2))
    tm = max(8, min(tm, Mp))
    tm = max(8, (tm // 8) * 8)        # sublane-aligned
    return int(tm)


def _block_diag(w, g):
    """(K, C) -> (g*K, g*C) block-diagonal (group b of packed output = row b of pack)."""
    if g == 1:
        return w
    K, C = w.shape
    eye = jnp.eye(g, dtype=w.dtype)
    return jnp.einsum("ab,kc->akbc", eye, w).reshape(g * K, g * C)


# --------------------------------- kernels -----------------------------------

def _gram_stats_kernel(x_ref, gram_ref, csum_ref, *, mp_actual, tm, mask_last):
    """Pass 1 (Gram form): per-tile X^T X and column sums of the packed input."""
    x = x_ref[...]
    if mask_last:
        rows = pl.program_id(0) * tm + jax.lax.broadcasted_iota(jnp.int32, x.shape, 0)
        x = jnp.where(rows < mp_actual, x, jnp.zeros_like(x))
    gram_ref[...] = jax.lax.dot_general(
        x, x, (((0,), (0,)), ((), ())), preferred_element_type=jnp.float32)
    csum_ref[...] = jnp.sum(x.astype(jnp.float32), axis=0, keepdims=True)


def _moment_stats_kernel(x_ref, w_ref, sum_ref, sq_ref, *, mp_actual, tm, mask_last):
    """Pass 1 (moment form, K > Cout): sum / sum-of-squares of x@W (bias added in glue)."""
    acc = jnp.dot(x_ref[...], w_ref[...], preferred_element_type=jnp.float32)
    if mask_last:
        rows = pl.program_id(0) * tm + jax.lax.broadcasted_iota(jnp.int32, acc.shape, 0)
        acc = jnp.where(rows < mp_actual, acc, 0.0)
    sum_ref[...] = jnp.sum(acc, axis=0, keepdims=True)
    sq_ref[...] = jnp.sum(acc * acc, axis=0, keepdims=True)


def _apply_kernel(x_ref, w_ref, shift_ref, o_ref, *, relu):
    """Pass 2: matmul with BN scale folded into W, add folded shift, ReLU, store."""
    v = jnp.dot(x_ref[...], w_ref[...], preferred_element_type=jnp.float32)
    v = v + shift_ref[...]
    if relu:
        v = jnp.maximum(v, 0.0)
    o_ref[...] = v.astype(o_ref.dtype)


# --------------------------- fused conv+BN+ReLU core -------------------------

def _conv_bn_relu_rows(xcol, w_mat, b_vec, *, activation, eps, tm):
    """xcol: (M, K) native dtype, w_mat: (K, Cout) native dtype, b_vec: (Cout,) f32."""
    M, K = xcol.shape
    Cout = w_mat.shape[1]
    cdt = xcol.dtype
    out_dtype = cdt

    # Lane packing: fold g rows into the lane dimension (free row-major views).
    g = _pick_pack(M, Cout)
    Mp, Kp, Coutp = M // g, g * K, g * Cout
    xpack = xcol.reshape(Mp, Kp)

    budget, vmem_limit = _vmem_budget()
    esize = jnp.dtype(cdt).itemsize
    tm = _pick_tm(tm, Mp, Kp, Coutp, esize, jnp.dtype(out_dtype).itemsize, budget)
    n_tiles = pl.cdiv(Mp, tm)
    mask_last = (Mp % tm) != 0
    cparams = pltpu.CompilerParams(dimension_semantics=("parallel",),
                                   vmem_limit_bytes=vmem_limit)

    w32 = w_mat.astype(jnp.float32)
    b32 = b_vec.astype(jnp.float32)

    # ---- Pass 1: batch statistics (per-tile partials, reduced in tiny glue) ----
    use_gram = Kp <= Coutp
    if use_gram:
        gram, csum = pl.pallas_call(
            functools.partial(_gram_stats_kernel,
                              mp_actual=Mp, tm=tm, mask_last=mask_last),
            out_shape=(jax.ShapeDtypeStruct((n_tiles, Kp, Kp), jnp.float32),
                       jax.ShapeDtypeStruct((n_tiles, 1, Kp), jnp.float32)),
            grid_spec=pltpu.PrefetchScalarGridSpec(
                num_scalar_prefetch=0,
                grid=(n_tiles,),
                in_specs=[pl.BlockSpec((tm, Kp), lambda i: (i, 0))],
                out_specs=(pl.BlockSpec((None, Kp, Kp), lambda i: (i, 0, 0)),
                           pl.BlockSpec((None, 1, Kp), lambda i: (i, 0, 0)))),
            compiler_params=cparams,
        )(xpack)
        Gp = jnp.sum(gram, axis=0)                            # (Kp, Kp)
        sp = jnp.sum(csum[:, 0, :], axis=0)                   # (Kp,)
        G = jnp.einsum("akal->kl", Gp.reshape(g, K, g, K)) if g > 1 else Gp
        s_x = sp.reshape(g, K).sum(axis=0)                    # (K,)
        mu_x = s_x / M
        xw_mean = mu_x @ w32                                  # E[x·w_c]
        m2 = jnp.einsum("kc,kl,lc->c", w32, G, w32) / M       # E[(x·w_c)^2]
        mean = xw_mean + b32
        var = jnp.maximum(m2 - xw_mean * xw_mean, 0.0)        # clamp: cancellation guard
    else:
        # Moment fallback for large-K (im2col) shapes; bias kept out of the kernel.
        w_blk0 = _block_diag(w32, g).astype(cdt)
        psum, psq = pl.pallas_call(
            functools.partial(_moment_stats_kernel,
                              mp_actual=Mp, tm=tm, mask_last=mask_last),
            out_shape=(jax.ShapeDtypeStruct((n_tiles, 1, Coutp), jnp.float32),
                       jax.ShapeDtypeStruct((n_tiles, 1, Coutp), jnp.float32)),
            grid_spec=pltpu.PrefetchScalarGridSpec(
                num_scalar_prefetch=0,
                grid=(n_tiles,),
                in_specs=[pl.BlockSpec((tm, Kp), lambda i: (i, 0)),
                          pl.BlockSpec((Kp, Coutp), lambda i: (0, 0))],
                out_specs=(pl.BlockSpec((None, 1, Coutp), lambda i: (i, 0, 0)),
                           pl.BlockSpec((None, 1, Coutp), lambda i: (i, 0, 0)))),
            compiler_params=cparams,
        )(xpack, w_blk0)
        s = jnp.sum(psum[:, 0, :], axis=0).reshape(g, Cout).sum(axis=0)
        sq = jnp.sum(psq[:, 0, :], axis=0).reshape(g, Cout).sum(axis=0)
        xw_mean = s / M
        mean = xw_mean + b32
        var = jnp.maximum(sq / M - xw_mean * xw_mean, 0.0)

    # ---- Tiny per-channel finalize (glue); gamma = 1, beta = 0 at module init ----
    inv_std = jax.lax.rsqrt(var + eps)
    shift = (b32 - mean) * inv_std                            # folded bias + mean
    w_scaled_blk = _block_diag(w32 * inv_std[None, :], g).astype(cdt)
    shift_blk = jnp.tile(shift, (g,)).reshape(1, Coutp).astype(jnp.float32)

    # ---- Pass 2: recompute matmul, fused BN affine + ReLU, lane-dense store ----
    out = pl.pallas_call(
        functools.partial(_apply_kernel, relu=activation),
        out_shape=jax.ShapeDtypeStruct((Mp, Coutp), out_dtype),
        grid_spec=pltpu.PrefetchScalarGridSpec(
            num_scalar_prefetch=0,
            grid=(n_tiles,),
            in_specs=[pl.BlockSpec((tm, Kp), lambda i: (i, 0)),
                      pl.BlockSpec((Kp, Coutp), lambda i: (0, 0)),
                      pl.BlockSpec((1, Coutp), lambda i: (0, 0))],
            out_specs=pl.BlockSpec((tm, Coutp), lambda i: (i, 0))),
        compiler_params=cparams,
    )(xpack, w_scaled_blk, shift_blk)
    return out.reshape(M, Cout)


# --------------------------------- public API --------------------------------

def conv2d_forward(x, weight, bias=None, *, kernel_size=(1, 1), stride=(1, 1),
                   padding="VALID", use_bias=True, activation=True,
                   eps=1e-5, tm=2048):
    """Forward pass of conv2d_ (training-mode BatchNorm, gamma=1, beta=0)."""
    kh, kw = kernel_size
    sh, sw = stride
    if padding != "VALID":
        # TODO(synk): the reference module's 'SAME' branch is broken in PyTorch
        # (math.ceil on a tuple / indexing an int); only 'VALID' (zero pad) works.
        raise NotImplementedError("only padding='VALID' is supported")
    # TODO(synk): BatchNorm2d running_mean / running_var updates (momentum / bn_decay)
    # are not tracked; only the training-mode forward normalization is computed.

    Cout, Cin = weight.shape[0], weight.shape[1]
    cdt = jnp.bfloat16 if x.dtype == jnp.bfloat16 else jnp.float32
    b32 = (bias.astype(jnp.float32) if (use_bias and bias is not None)
           else jnp.zeros((Cout,), jnp.float32)).reshape((Cout,))

    if kh == 1 and kw == 1 and sh == 1 and sw == 1:
        # Fast path: the two permutes cancel for a 1x1 conv -> per-position channel
        # transform. No transposes, no pad, no dtype up-cast; reshapes are free views.
        B, d1, d2, _ = x.shape
        M = B * d1 * d2
        xcol = x.reshape(M, Cin).astype(cdt)
        w_mat = weight.reshape(Cout, Cin).T.astype(cdt)
        out = _conv_bn_relu_rows(xcol, w_mat, b32,
                                 activation=activation, eps=eps, tm=tm)
        return out.reshape(B, d1, d2, Cout)

    # General path: NCHW + im2col (column order (Cin, kh*kw) matches PyTorch's
    # weight.reshape(Cout, Cin*kh*kw)).
    # TODO(synk): move im2col + the output permute into the kernel (BlockSpec index_map
    # over (Ho,Wo) tiles + a K-reduction grid axis) and switch to a materialize-y
    # strategy when K >= 2*Cout to avoid the extra XLA HBM passes at scale.
    x_nchw = jnp.transpose(x, (0, 3, 2, 1)).astype(cdt)           # (B, Cin, H, W)
    B, _, H, W = x_nchw.shape
    Ho = (H - kh) // sh + 1
    Wo = (W - kw) // sw + 1
    patches = []
    for di in range(kh):
        for dj in range(kw):
            patches.append(x_nchw[:, :, di:di + (Ho - 1) * sh + 1:sh,
                                        dj:dj + (Wo - 1) * sw + 1:sw])
    xcol = jnp.stack(patches, axis=2)                 # (B, Cin, kh*kw, Ho, Wo)
    xcol = jnp.transpose(xcol, (0, 3, 4, 1, 2))       # (B, Ho, Wo, Cin, kh*kw)
    M = B * Ho * Wo
    K = Cin * kh * kw
    xcol = xcol.reshape(M, K)
    w_mat = weight.reshape(Cout, K).T.astype(cdt)
    out = _conv_bn_relu_rows(xcol, w_mat, b32,
                             activation=activation, eps=eps, tm=tm)
    out = out.reshape(B, Ho, Wo, Cout)
    return jnp.transpose(out, (0, 2, 1, 3))           # final permute(0,3,2,1)


def init_conv2d_params(key, input_dims, output_dims, kernel_size):
    """Deterministic xavier_uniform_ weight (torch fan in/out) + zero bias."""
    kh, kw = kernel_size
    fan_in = input_dims * kh * kw
    fan_out = output_dims * kh * kw
    bound = math.sqrt(6.0 / (fan_in + fan_out))
    weight = jax.random.uniform(key, (output_dims, input_dims, kh, kw),
                                jnp.float32, -bound, bound)
    bias = jnp.zeros((output_dims,), jnp.float32)
    return weight, bias


# -------------------------------- reference ----------------------------------

def _reference_forward(x, weight, bias, *, kernel_size, stride, activation, eps):
    """Pure-JAX reference of the PyTorch module forward (training-mode BN)."""
    del kernel_size
    xn = jnp.transpose(x, (0, 3, 2, 1)).astype(jnp.float32)       # permute -> NCHW
    y = jax.lax.conv_general_dilated(
        xn, weight.astype(jnp.float32), window_strides=stride, padding="VALID",
        dimension_numbers=("NCHW", "OIHW", "NCHW"))
    y = y + bias.astype(jnp.float32)[None, :, None, None]
    mean = jnp.mean(y, axis=(0, 2, 3), keepdims=True)
    var = jnp.var(y, axis=(0, 2, 3), keepdims=True)
    z = (y - mean) * jax.lax.rsqrt(var + eps)
    if activation:
        z = jnp.maximum(z, 0.0)
    return jnp.transpose(z, (0, 3, 2, 1))                         # final permute


# ----------------------------------- main -------------------------------------

if __name__ == "__main__":
    key = jax.random.PRNGKey(0)
    k_x, k_w, k_x2, k_w2, k_b2 = jax.random.split(key, 5)

    # ---- Test 1: 1x1 "FC" path (how MemeTransformer uses conv2d_) ----
    B, num_step, num_vertex, Cin, Cout = 2, 8, 16, 4, 32
    x = jax.random.normal(k_x, (B, num_step, num_vertex, Cin), jnp.float32)
    weight, bias = init_conv2d_params(k_w, Cin, Cout, (1, 1))

    fwd = jax.jit(functools.partial(conv2d_forward, kernel_size=(1, 1), stride=(1, 1),
                                    padding="VALID", use_bias=True, activation=True))
    out = jax.block_until_ready(fwd(x, weight, bias))
    ref = _reference_forward(x, weight, bias, kernel_size=(1, 1), stride=(1, 1),
                             activation=True, eps=1e-5)
    assert out.shape == (B, num_step, num_vertex, Cout), out.shape
    assert out.dtype == jnp.float32
    assert bool(jnp.all(jnp.isfinite(out)))
    err = float(jnp.max(jnp.abs(out - ref)))
    assert err < 5e-2, f"1x1 path max abs err {err}"

    # Small tm -> exercises multi-tile grid + ragged-tile masking on the Gram-stats path.
    out_b = jax.block_until_ready(
        jax.jit(functools.partial(conv2d_forward, kernel_size=(1, 1), stride=(1, 1),
                                  padding="VALID", use_bias=True, activation=True,
                                  tm=24))(x, weight, bias))
    err_b = float(jnp.max(jnp.abs(out_b - ref)))
    assert err_b < 5e-2, f"1x1 tiled path max abs err {err_b}"

    # bf16 I/O path (no f32 up-cast, bf16 output).
    out_bf = jax.block_until_ready(
        fwd(x.astype(jnp.bfloat16), weight.astype(jnp.bfloat16),
            bias.astype(jnp.bfloat16)))
    assert out_bf.dtype == jnp.bfloat16
    err_bf = float(jnp.max(jnp.abs(out_bf.astype(jnp.float32) - ref)))
    assert err_bf < 2.5e-1, f"bf16 path max abs err {err_bf}"

    # ---- Test 2: general conv path (3x3) -> exercises the moment-stats fallback ----
    Cin2, Cout2 = 6, 32
    x2 = jax.random.normal(k_x2, (B, num_step, num_vertex, Cin2), jnp.float32)
    w2, _ = init_conv2d_params(k_w2, Cin2, Cout2, (3, 3))
    b2 = 0.1 * jax.random.normal(k_b2, (Cout2,), jnp.float32)
    fwd2 = jax.jit(functools.partial(conv2d_forward, kernel_size=(3, 3), stride=(1, 1),
                                     padding="VALID", use_bias=True, activation=True))
    out2 = jax.block_until_ready(fwd2(x2, w2, b2))
    ref2 = _reference_forward(x2, w2, b2, kernel_size=(3, 3), stride=(1, 1),
                              activation=True, eps=1e-5)
    assert out2.shape == ref2.shape, (out2.shape, ref2.shape)
    assert bool(jnp.all(jnp.isfinite(out2)))
    err2 = float(jnp.max(jnp.abs(out2 - ref2)))
    assert err2 < 5e-2, f"general path max abs err {err2}"

    print("KERNEL_OK")
</pallas_src>

<mosaic_0001>
module attributes {stable_mosaic.version = 11 : i64} {
  func.func @_gram_stats_kernel(%arg0: i32, %arg1: memref<64x16xf32, #tpu.memory_space<vmem>>, %arg2: memref<1x16x16xf32, #tpu.memory_space<vmem>>, %arg3: memref<1x1x16xf32, #tpu.memory_space<vmem>>) attributes {dimension_semantics = [#tpu.dimension_semantics<parallel>], iteration_bounds = array<i64: 1>, scalar_prefetch = 0 : i64, scratch_operands = 0 : i64, tpu.core_type = #tpu.core_type<tc>, window_params = [{transform_indices = @transform_0, window_bounds = array<i64: 64, 16>}, {transform_indices = @transform_1, window_bounds = array<i64: 1, 16, 16>}, {transform_indices = @transform_2, window_bounds = array<i64: 1, 1, 16>}]} {
    %c0 = arith.constant 0 : index
    %c0_0 = arith.constant 0 : index
    %0 = vector.load %arg1[%c0, %c0_0] : memref<64x16xf32, #tpu.memory_space<vmem>>, vector<64x16xf32>
    %cst = arith.constant dense<0.000000e+00> : vector<16x16xf32>
    %1 = tpu.matmul %0, %0, %cst {dimension_numbers = #tpu.dot_dimension_numbers<[0], [0], [1], [1], [0, 1, 1, 1], [], []>} : vector<64x16xf32>, vector<64x16xf32>, vector<16x16xf32> -> vector<16x16xf32>
    %c0_1 = arith.constant 0 : index
    %c0_2 = arith.constant 0 : index
    %c0_3 = arith.constant 0 : index
    %2 = vector.load %arg2[%c0_1, %c0_2, %c0_3] : memref<1x16x16xf32, #tpu.memory_space<vmem>>, vector<1x16x16xf32>
    %3 = vector.shape_cast %2 : vector<1x16x16xf32> to vector<16x16xf32>
    %4 = vector.shape_cast %1 : vector<16x16xf32> to vector<1x16x16xf32>
    tpu.vector_store %arg2[%c0_1, %c0_2, %c0_3], %4 {strides = array<i32>} : memref<1x16x16xf32, #tpu.memory_space<vmem>>, vector<1x16x16xf32>,
    %cst_4 = arith.constant dense<0.000000e+00> : vector<16xf32>
    %5 = vector.multi_reduction <add>, %0, %cst_4 [0] : vector<64x16xf32> to vector<16xf32>
    %6 = vector.shape_cast %5 : vector<16xf32> to vector<1x16xf32>
    %c0_5 = arith.constant 0 : index
    %c0_6 = arith.constant 0 : index
    %c0_7 = arith.constant 0 : index
    %7 = vector.load %arg3[%c0_5, %c0_6, %c0_7] : memref<1x1x16xf32, #tpu.memory_space<vmem>>, vector<1x1x16xf32>
    %8 = vector.shape_cast %7 : vector<1x1x16xf32> to vector<1x16xf32>
    %9 = vector.shape_cast %6 : vector<1x16xf32> to vector<1x1x16xf32>
    tpu.vector_store %arg3[%c0_5, %c0_6, %c0_7], %9 {strides = array<i32>} : memref<1x1x16xf32, #tpu.memory_space<vmem>>, vector<1x1x16xf32>,
    return
  }
  func.func @transform_0(%arg0: i32) -> (i32, i32) {
    %c0_i32 = arith.constant 0 : i32
    %c0_i32_0 = arith.constant 0 : i32
    return %arg0, %c0_i32 : i32, i32
  }
  func.func @transform_1(%arg0: i32) -> (i32, i32, i32) {
    %c0_i32 = arith.constant 0 : i32
    %c0_i32_0 = arith.constant 0 : i32
    %c0_i32_1 = arith.constant 0 : i32
    return %arg0, %c0_i32, %c0_i32_0 : i32, i32, i32
  }
  func.func @transform_2(%arg0: i32) -> (i32, i32, i32) {
    %c0_i32 = arith.constant 0 : i32
    %c0_i32_0 = arith.constant 0 : i32
    %c0_i32_1 = arith.constant 0 : i32
    return %arg0, %c0_i32, %c0_i32_0 : i32, i32, i32
  }
}

module attributes {stable_mosaic.version = 11 : i64} {
  func.func @_apply_kernel(%arg0: i32, %arg1: memref<64x16xf32, #tpu.memory_space<vmem>>, %arg2: memref<16x128xf32, #tpu.memory_space<vmem>>, %arg3: memref<1x128xf32, #tpu.memory_space<vmem>>, %arg4: memref<64x128xf32, #tpu.memory_space<vmem>>) attributes {dimension_semantics = [#tpu.dimension_semantics<parallel>], iteration_bounds = array<i64: 1>, scalar_prefetch = 0 : i64, scratch_operands = 0 : i64, tpu.core_type = #tpu.core_type<tc>, window_params = [{transform_indices = @transform_0, window_bounds = array<i64: 64, 16>}, {pipeline_mode = #tpu.pipeline_mode<synchronous>, transform_indices = @transform_1, window_bounds = array<i64: 16, 128>}, {pipeline_mode = #tpu.pipeline_mode<synchronous>, transform_indices = @transform_2, window_bounds = array<i64: 1, 128>}, {transform_indices = @transform_3, window_bounds = array<i64: 64, 128>}]} {
    %c0 = arith.constant 0 : index
    %c0_0 = arith.constant 0 : index
    %0 = vector.load %arg1[%c0, %c0_0] : memref<64x16xf32, #tpu.memory_space<vmem>>, vector<64x16xf32>
    %c0_1 = arith.constant 0 : index
    %c0_2 = arith.constant 0 : index
    %1 = vector.load %arg2[%c0_1, %c0_2] : memref<16x128xf32, #tpu.memory_space<vmem>>, vector<16x128xf32>
    %cst = arith.constant dense<0.000000e+00> : vector<64x128xf32>
    %2 = tpu.matmul %0, %1, %cst {dimension_numbers = #tpu.dot_dimension_numbers<[1], [0], [0], [1], [0, 0, 1, 1], [], []>} : vector<64x16xf32>, vector<16x128xf32>, vector<64x128xf32> -> vector<64x128xf32>
    %c0_3 = arith.constant 0 : index
    %c0_4 = arith.constant 0 : index
    %3 = vector.load %arg3[%c0_3, %c0_4] : memref<1x128xf32, #tpu.memory_space<vmem>>, vector<1x128xf32>
    %4 = vector.broadcast %3 : vector<1x128xf32> to vector<64x128xf32>
    %5 = arith.addf %2, %4 : vector<64x128xf32>
    %cst_5 = arith.constant 0.000000e+00 : f32
    %6 = vector.broadcast %cst_5 : f32 to vector<64x128xf32>
    %7 = arith.maximumf %5, %6 : vector<64x128xf32>
    %c0_6 = arith.constant 0 : index
    %c0_7 = arith.constant 0 : index
    %8 = vector.load %arg4[%c0_6, %c0_7] : memref<64x128xf32, #tpu.memory_space<vmem>>, vector<64x128xf32>
    tpu.vector_store %arg4[%c0_6, %c0_7], %7 {strides = array<i32>} : memref<64x128xf32, #tpu.memory_space<vmem>>, vector<64x128xf32>,
    return
  }
  func.func @transform_0(%arg0: i32) -> (i32, i32) {
    %c0_i32 = arith.constant 0 : i32
    %c0_i32_0 = arith.constant 0 : i32
    return %arg0, %c0_i32 : i32, i32
  }
  func.func @transform_1(%arg0: i32) -> (i32, i32) {
    %c0_i32 = arith.constant 0 : i32
    %c0_i32_0 = arith.constant 0 : i32
    %c0_i32_1 = arith.constant 0 : i32
    return %c0_i32, %c0_i32_0 : i32, i32
  }
  func.func @transform_2(%arg0: i32) -> (i32, i32) {
    %c0_i32 = arith.constant 0 : i32
    %c0_i32_0 = arith.constant 0 : i32
    %c0_i32_1 = arith.constant 0 : i32
    return %c0_i32, %c0_i32_0 : i32, i32
  }
  func.func @transform_3(%arg0: i32) -> (i32, i32) {
    %c0_i32 = arith.constant 0 : i32
    %c0_i32_0 = arith.constant 0 : i32
    return %arg0, %c0_i32 : i32, i32
  }
}

</mosaic_0001>

<llo_original>
// kernel: tile.8
$region0: #{tile.8}
  #allocation0 [shape = 's32[1]{0}', space=sflag, size = 0x4, scoped, tag = 'scoped memory for tile.8']
  %s0 = inlined_call_operand.vmem [shape: f32[32], index: 0, kind: input, shape index: {}]
  %s1 = inlined_call_operand.vmem [shape: f32[4,32], index: 1, kind: output, shape index: {}]
  // Predicated region
  $region2: #{tile.8} parent=0 // pred_check
    _
  $region3: #{tile.8} parent=0 // pred_check_branch
    %3 = sbr.rel (0) target = $region5
  $region4: #{tile.8} parent=0 // pred_region
    _
  $region5: #{tile.8} parent=0 // pred_fallthru
    _
  %v4 = vld [vmem:[%s0] ss:$0 sm:$0xff]
  %5 = vst [vmem:[%s1] sm:$0xf] %v4

// kernel: tile.9
$region0: #{tile.9}
  %s0 = inlined_call_operand.vmem [shape: f32[4,32], index: 0, kind: input, shape index: {}]
  %s1 = inlined_call_operand.vmem [shape: f32[1,128], index: 1, kind: output, shape index: {}]
  $region1: #{tile.9} parent=0
    #allocation0 [shape = 'u8[4096]{0}', space=vmem, size = 0x1000, scoped, tag = 'scoped mem for output reshape']
    #allocation1 [shape = 'u8[4096]{0}', space=vmem, size = 0x1000, scoped, tag = 'scoped mem for input reshape']
    %s3 = sshll.u32 1, 4
    %s4 = ssub.s32 %s3, 1
    %v5 = vld [vmem:[%s0] sm:%s4]
    %6 = vst [vmem:[#allocation1] sm:%s4] %v5
    %v7 = vld [vmem:[#allocation1] sm:$0x1]
    %vm8 = vcmask 261120
    %9 = vst.msk [vmem:[#allocation0] sm:$0x1] %vm8, %v7
    %s10 = scalar_lea.vmem [#allocation1], 3
    %v11 = vld [vmem:[%s10] sm:$0x1]
    %12 = vrot.lane.b32.xlu0 %v11, 96
    %v13 = vpop.permute.xlu0 %12
    %vm14 = vcmask 1048320
    %15 = vst.msk [vmem:[#allocation0] sm:$0x1] %vm14, %v13
    %s16 = scalar_lea.vmem [#allocation1], 2
    %v17 = vld [vmem:[%s16] sm:$0x1]
    %18 = vrot.lane.b32.xlu0 %v17, 64
    %v19 = vpop.permute.xlu0 %18
    %vm20 = vcmask 785920
    %21 = vst.msk [vmem:[#allocation0] sm:$0x1] %vm20, %v19
    %s22 = scalar_lea.vmem [#allocation1], 1
    %v23 = vld [vmem:[%s22] sm:$0x1]
    %24 = vrot.lane.b32.xlu0 %v23, 32
    %v25 = vpop.permute.xlu0 %24
    %vm26 = vcmask 523520
    %27 = vst.msk [vmem:[#allocation0] sm:$0x1] %vm26, %v25
    %s29 = sshll.u32 1, 1
    %s30 = ssub.s32 %s29, 1
    %v32 = vld [vmem:[#allocation0] sm:%s30]
    %s33 = sshll.u32 1, 1
    %s34 = ssub.s32 %s33, 1
    %35 = vst [vmem:[%s1] sm:%s34] %v32

// kernel: conv2d_forward.2
$region0: #{conv2d_forward.2}
  #allocation0 [shape = 'u32[]', space=smem, size = 0x4, offset = 0x4, fixed_abs, tag = 'smem constant byte address 0x4 - core index']
  #allocation1 [shape = 'u32[144,128]{1,0:T(1,128)}', space=vmem, size = 0x12000, scoped, tag = 'internal scratch']
  %s0 = inlined_call_operand.vmem [shape: f32[64,16], index: 0, kind: input, shape index: {}]
  %s1 = inlined_call_operand.vmem [shape: f32[1,16,16], index: 1, kind: output, shape index: {0}]
  %s2 = inlined_call_operand.vmem [shape: f32[1,1,16], index: 2, kind: output, shape index: {1}]
  %3 = xla_tuple %s1, %s2
  %s4 = sld [smem:[#allocation0]]
  $region22: #{conv2d_forward.2} parent=0
    _
  %s6 = ssub.s32 1, %s4
  %s7 = scalar_select 0, %s6, %s4
  // Predicated region
  $region2: #{conv2d_forward.2} parent=0 // pred_check
    _
  $region3: #{conv2d_forward.2} parent=0 // pred_check_branch
    %9 = sbr.rel (0) target = $region5
  $region4: #{conv2d_forward.2} parent=0 // pred_region
    _
  $region5: #{conv2d_forward.2} parent=0 // pred_fallthru
    _
  %v10 = vld [vmem:[%s0] sm:$0xff]
  %v11 = vld [vmem:[%s0 + $0x8] sm:$0xff]
  %v12 = vld [vmem:[%s0 + $0x10] sm:$0xff]
  %v13 = vld [vmem:[%s0 + $0x18] sm:$0xff]
  %v14 = vld [vmem:[%s0 + $0x20] sm:$0xff]
  %v15 = vld [vmem:[%s0 + $0x28] sm:$0xff]
  %v16 = vld [vmem:[%s0 + $0x30] sm:$0xff]
  %v17 = vld [vmem:[%s0 + $0x38] sm:$0xff]
  %18 = vxpose.xlu0.b32.start [1/16] %v10, 128
  %19 = vxpose.xlu0.b32.cont [2/16] %v11, 128
  %20 = vxpose.xlu0.b32.cont [3/16] %v12, 128
  %21 = vxpose.xlu0.b32.cont [4/16] %v13, 128
  %22 = vxpose.xlu0.b32.cont [5/16] %v14, 128
  %23 = vxpose.xlu0.b32.cont [6/16] %v15, 128
  %24 = vxpose.xlu0.b32.cont [7/16] %v16, 128
  %25 = vxpose.xlu0.b32.cont [8/16] %v17, 128
  %26 = vxpose.xlu0.b32.cont [9/16] 0.0, 128
  %27 = vxpose.xlu0.b32.cont [10/16] 0.0, 128
  %28 = vxpose.xlu0.b32.cont [11/16] 0.0, 128
  %29 = vxpose.xlu0.b32.cont [12/16] 0.0, 128
  %30 = vxpose.xlu0.b32.cont [13/16] 0.0, 128
  %31 = vxpose.xlu0.b32.cont [14/16] 0.0, 128
  %32 = vxpose.xlu0.b32.cont [15/16] 0.0, 128
  %33 = vxpose.xlu0.b32.end [16/16] 0.0, 128
  %v34 = vpop.trf.xlu0
  %v35 = vpop.trf.xlu0
  %v36 = vpop.trf.xlu0
  %v37 = vpop.trf.xlu0
  %v38 = vpop.trf.xlu0
  %v39 = vpop.trf.xlu0
  %v40 = vpop.trf.xlu0
  %v41 = vpop.trf.xlu0
  %v42 = vpop.trf.xlu0
  %v43 = vpop.trf.xlu0
  %v44 = vpop.trf.xlu0
  %v45 = vpop.trf.xlu0
  %v46 = vpop.trf.xlu0
  %v47 = vpop.trf.xlu0
  %v48 = vpop.trf.xlu0
  %v49 = vpop.trf.xlu0
  %vm50 = vcmask 523264
  %v52 = vsel %vm50, %v34, 0
  %v55 = vsel %vm50, %v35, 0
  %57 = vmatprep.subr.mxu0 0.0
  %58 = vmatpush1.msra.mxu0 0.0
  %59 = vmatprep.subr.mxu0 0.0
  %60 = vmatpush1.msra.mxu0 0.0
  %61 = vmatprep.subr.mxu0 0.0
  %62 = vmatpush1.msra.mxu0 0.0
  %63 = vmatprep.subr.mxu0 0.0
  %64 = vmatpush1.msra.mxu0 0.0
  %65 = vmatprep.subr.mxu0 0.0
  %66 = vmatpush1.msra.mxu0 0.0
  %67 = vmatprep.subr.mxu0 0.0
  %68 = vmatpush1.msra.mxu0 0.0
  %69 = vmatprep.subr.mxu0 0.0
  %70 = vmatpush1.msra.mxu0 0.0
  %71 = vmatprep.subr.mxu0 0.0
  %72 = vmatpush1.msra.mxu0 0.0
  %73 = vmatprep.subr.mxu0 0.0
  %74 = vmatpush1.msra.mxu0 %v17
  %75 = vmatprep.subr.mxu0 0.0
  %76 = vmatpush1.msra.mxu0 %v16
  %77 = vmatprep.subr.mxu0 0.0
  %78 = vmatpush1.msra.mxu0 %v15
  %79 = vmatprep.subr.mxu0 0.0
  %80 = vmatpush1.msra.mxu0 %v14
  %81 = vmatprep.subr.mxu0 0.0
  %82 = vmatpush1.msra.mxu0 %v13
  %83 = vmatprep.subr.mxu0 0.0
  %84 = vmatpush1.msra.mxu0 %v12
  %85 = vmatprep.subr.mxu0 0.0
  %86 = vmatpush1.msra.mxu0 %v11
  %87 = vmatprep.subr.mxu0 0.0
  %88 = vmatpush1.msra.mxu0 %v10
  %89 = vmatprep.subr.mxu0 0.0
  %90 = vmatpush2.msra.mxu0 0.0
  %91 = vmatprep.subr.mxu0 0.0
  %92 = vmatpush2.msra.mxu0 0.0
  %93 = vmatprep.subr.mxu0 0.0
  %94 = vmatpush2.msra.mxu0 0.0
  %95 = vmatprep.subr.mxu0 0.0
  %96 = vmatpush2.msra.mxu0 0.0
  %97 = vmatprep.subr.mxu0 0.0
  %98 = vmatpush2.msra.mxu0 0.0
  %99 = vmatprep.subr.mxu0 0.0
  %100 = vmatpush2.msra.mxu0 0.0
  %101 = vmatprep.subr.mxu0 0.0
  %102 = vmatpush2.msra.mxu0 0.0
  %103 = vmatprep.subr.mxu0 0.0
  %104 = vmatpush2.msra.mxu0 0.0
  %105 = vmatprep.subr.mxu0 0.0
  %106 = vmatpush2.msra.mxu0 0.0
  %107 = vmatprep.subr.mxu0 0.0
  %108 = vmatpush2.msra.mxu0 0.0
  %109 = vmatprep.subr.mxu0 0.0
  %110 = vmatpush2.msra.mxu0 0.0
  %111 = vmatprep.subr.mxu0 0.0
  %112 = vmatpush2.msra.mxu0 0.0
  %113 = vmatprep.subr.mxu0 0.0
  %114 = vmatpush2.msra.mxu0 0.0
  %115 = vmatprep.subr.mxu0 0.0
  %116 = vmatpush2.msra.mxu0 0.0
  %117 = vmatprep.subr.mxu0 0.0
  %118 = vmatpush2.msra.mxu0 0.0
  %119 = vmatprep.subr.mxu0 0.0
  %120 = vmatpush2.msra.mxu0 0.0
  %121 = vmatprep.mubr.f32.mxu0 0.0
  %122 = vmatmul.mubr.f32.gmra.mxu0 %v52
  %v123 = vpop.f32.mrf.mxu0
  %v124 = vadd.f32 0.0, %v123
  %v125 = vpop.f32.mrf.mxu0
  %126 = vmatprep.mubr.f32.mxu0 0.0
  %127 = vmatmul.mubr.f32.gmra.mxu0 %v55
  %v128 = vpop.f32.mrf.mxu0
  %v129 = vadd.f32 0.0, %v128
  %v130 = vpop.f32.mrf.mxu0
  %131 = vdwg.mxu0
  %vm132 = vcmask 130048
  %133 = vst.msk [vmem:[%s1] sm:$0xff] %vm132, %v124
  %134 = vst.msk [vmem:[%s1 + $0x8] sm:$0xff] %vm132, %v129
  %v135 = vsel %vm132, %v10, 0.0
  %v136 = vsel %vm132, %v11, 0.0
  %v137 = vadd.f32 %v135, %v136
  %v138 = vsel %vm132, %v12, 0.0
  %v139 = vadd.f32 %v137, %v138
  %v140 = vsel %vm132, %v13, 0.0
  %v141 = vadd.f32 %v139, %v140
  %v142 = vsel %vm132, %v14, 0.0
  %v143 = vadd.f32 %v141, %v142
  %v144 = vsel %vm132, %v15, 0.0
  %v145 = vadd.f32 %v143, %v144
  %v146 = vsel %vm132, %v16, 0.0
  %v147 = vadd.f32 %v145, %v146
  %v148 = vsel %vm132, %v17, 0.0
  %v149 = vadd.f32 %v147, %v148
  %v150 = vrot.slane %v149, 4
  %v151 = vadd.f32 %v149, %v150
  %v152 = vrot.slane %v151, 2
  %v153 = vadd.f32 %v151, %v152
  %v154 = vrot.slane %v153, 1
  %v155 = vadd.f32 %v153, %v154
  %vm156 = vcmask 122880
  %157 = vst.msk [vmem:[%s2] sm:$0x1] %vm156, %v155
  // Predicated region
  $region6: #{conv2d_forward.2} parent=0 // pred_check
    _
  $region7: #{conv2d_forward.2} parent=0 // pred_check_branch
    %159 = sbr.rel (0) target = $region9
  $region8: #{conv2d_forward.2} parent=0 // pred_region
    _
  $region9: #{conv2d_forward.2} parent=0 // pred_fallthru
    _
  // Predicated region
  $region10: #{conv2d_forward.2} parent=0 // pred_check
    _
  $region11: #{conv2d_forward.2} parent=0 // pred_check_branch
    %161 = sbr.rel (0) target = $region13
  $region12: #{conv2d_forward.2} parent=0 // pred_region
    _
  $region13: #{conv2d_forward.2} parent=0 // pred_fallthru
    _
  // Predicated region
  $region14: #{conv2d_forward.2} parent=0 // pred_check
    _
  $region15: #{conv2d_forward.2} parent=0 // pred_check_branch
    %163 = sbr.rel (0) target = $region17
  $region16: #{conv2d_forward.2} parent=0 // pred_region
    _
  $region17: #{conv2d_forward.2} parent=0 // pred_fallthru
    _
  // Predicated region
  $region18: #{conv2d_forward.2} parent=0 // pred_check
    _
  $region19: #{conv2d_forward.2} parent=0 // pred_check_branch
    %165 = sbr.rel (0) target = $region21
  $region20: #{conv2d_forward.2} parent=0 // pred_region
    _
  $region21: #{conv2d_forward.2} parent=0 // pred_fallthru
    _

// kernel: conv2d_forward.3
$region0: #{conv2d_forward.3}
  #allocation0 [shape = 'u32[]', space=smem, size = 0x4, offset = 0x4, fixed_abs, tag = 'smem constant byte address 0x4 - core index']
  #allocation1 [shape = 'u32[144,128]{1,0:T(1,128)}', space=vmem, size = 0x12000, scoped, tag = 'internal scratch']
  %s0 = inlined_call_operand.vmem [shape: f32[64,16], index: 0, kind: input, shape index: {}]
  %s1 = inlined_call_operand.vmem [shape: f32[16,128], index: 1, kind: input, shape index: {}]
  %s2 = inlined_call_operand.vmem [shape: f32[1,128], index: 2, kind: input, shape index: {}]
  %s3 = inlined_call_operand.vmem [shape: f32[64,128], index: 3, kind: output, shape index: {}]
  %s4 = sld [smem:[#allocation0]]
  $region22: #{conv2d_forward.3} parent=0
    _
  %s6 = ssub.s32 1, %s4
  %s7 = scalar_select 0, %s6, %s4
  // Predicated region
  $region2: #{conv2d_forward.3} parent=0 // pred_check
    _
  $region3: #{conv2d_forward.3} parent=0 // pred_check_branch
    %9 = sbr.rel (0) target = $region5
  $region4: #{conv2d_forward.3} parent=0 // pred_region
    _
  $region5: #{conv2d_forward.3} parent=0 // pred_fallthru
    _
  // Predicated region
  $region6: #{conv2d_forward.3} parent=0 // pred_check
    _
  $region7: #{conv2d_forward.3} parent=0 // pred_check_branch
    %11 = sbr.rel (0) target = $region9
  $region8: #{conv2d_forward.3} parent=0 // pred_region
    _
  $region9: #{conv2d_forward.3} parent=0 // pred_fallthru
    _
  // Predicated region
  $region10: #{conv2d_forward.3} parent=0 // pred_check
    _
  $region11: #{conv2d_forward.3} parent=0 // pred_check_branch
    %13 = sbr.rel (0) target = $region13
  $region12: #{conv2d_forward.3} parent=0 // pred_region
    _
  $region13: #{conv2d_forward.3} parent=0 // pred_fallthru
    _
  %v14 = vld [vmem:[%s0] sm:$0xff]
  %v15 = vld [vmem:[%s0 + $0x8] sm:$0xff]
  %v16 = vld [vmem:[%s0 + $0x10] sm:$0xff]
  %v17 = vld [vmem:[%s0 + $0x18] sm:$0xff]
  %v18 = vld [vmem:[%s0 + $0x20] sm:$0xff]
  %v19 = vld [vmem:[%s0 + $0x28] sm:$0xff]
  %v20 = vld [vmem:[%s0 + $0x30] sm:$0xff]
  %v21 = vld [vmem:[%s0 + $0x38] sm:$0xff]
  %v22 = vld [vmem:[%s1] sm:$0xff]
  %v23 = vld [vmem:[%s1 + $0x8] sm:$0xff]
  %v24 = vld [vmem:[%s2] sm:$0x1]
  %v26 = vlaneseq
  %v27 = vshrl.u32 %v26, 7
  %v28 = vsub.s32 0, %v27
  %v29 = vrot.slane %v24, %v28
  %vm31 = vcmask 130048
  %v33 = vsel %vm31, %v14, 0
  %v36 = vsel %vm31, %v15, 0
  %v39 = vsel %vm31, %v16, 0
  %v42 = vsel %vm31, %v17, 0
  %v45 = vsel %vm31, %v18, 0
  %v48 = vsel %vm31, %v19, 0
  %v51 = vsel %vm31, %v20, 0
  %v54 = vsel %vm31, %v21, 0
  %56 = vmatprep.subr.mxu0 0.0
  %57 = vmatpush1.msra.mxu0 0.0
  %58 = vmatprep.subr.mxu0 0.0
  %59 = vmatpush1.msra.mxu0 0.0
  %60 = vmatprep.subr.mxu0 0.0
  %61 = vmatpush1.msra.mxu0 0.0
  %62 = vmatprep.subr.mxu0 0.0
  %63 = vmatpush1.msra.mxu0 0.0
  %64 = vmatprep.subr.mxu0 0.0
  %65 = vmatpush1.msra.mxu0 0.0
  %66 = vmatprep.subr.mxu0 0.0
  %67 = vmatpush1.msra.mxu0 0.0
  %68 = vmatprep.subr.mxu0 0.0
  %69 = vmatpush1.msra.mxu0 0.0
  %70 = vmatprep.subr.mxu0 0.0
  %71 = vmatpush1.msra.mxu0 0.0
  %72 = vmatprep.subr.mxu0 0.0
  %73 = vmatpush1.msra.mxu0 0.0
  %74 = vmatprep.subr.mxu0 0.0
  %75 = vmatpush1.msra.mxu0 0.0
  %76 = vmatprep.subr.mxu0 0.0
  %77 = vmatpush1.msra.mxu0 0.0
  %78 = vmatprep.subr.mxu0 0.0
  %79 = vmatpush1.msra.mxu0 0.0
  %80 = vmatprep.subr.mxu0 0.0
  %81 = vmatpush1.msra.mxu0 0.0
  %82 = vmatprep.subr.mxu0 0.0
  %83 = vmatpush1.msra.mxu0 0.0
  %84 = vmatprep.subr.mxu0 0.0
  %85 = vmatpush1.msra.mxu0 %v23
  %86 = vmatprep.subr.mxu0 0.0
  %87 = vmatpush1.msra.mxu0 %v22
  %88 = vmatprep.subr.mxu0 0.0
  %89 = vmatpush2.msra.mxu0 0.0
  %90 = vmatprep.subr.mxu0 0.0
  %91 = vmatpush2.msra.mxu0 0.0
  %92 = vmatprep.subr.mxu0 0.0
  %93 = vmatpush2.msra.mxu0 0.0
  %94 = vmatprep.subr.mxu0 0.0
  %95 = vmatpush2.msra.mxu0 0.0
  %96 = vmatprep.subr.mxu0 0.0
  %97 = vmatpush2.msra.mxu0 0.0
  %98 = vmatprep.subr.mxu0 0.0
  %99 = vmatpush2.msra.mxu0 0.0
  %100 = vmatprep.subr.mxu0 0.0
  %101 = vmatpush2.msra.mxu0 0.0
  %102 = vmatprep.subr.mxu0 0.0
  %103 = vmatpush2.msra.mxu0 0.0
  %104 = vmatprep.subr.mxu0 0.0
  %105 = vmatpush2.msra.mxu0 0.0
  %106 = vmatprep.subr.mxu0 0.0
  %107 = vmatpush2.msra.mxu0 0.0
  %108 = vmatprep.subr.mxu0 0.0
  %109 = vmatpush2.msra.mxu0 0.0
  %110 = vmatprep.subr.mxu0 0.0
  %111 = vmatpush2.msra.mxu0 0.0
  %112 = vmatprep.subr.mxu0 0.0
  %113 = vmatpush2.msra.mxu0 0.0
  %114 = vmatprep.subr.mxu0 0.0
  %115 = vmatpush2.msra.mxu0 0.0
  %116 = vmatprep.subr.mxu0 0.0
  %117 = vmatpush2.msra.mxu0 0.0
  %118 = vmatprep.subr.mxu0 0.0
  %119 = vmatpush2.msra.mxu0 0.0
  %120 = vmatprep.mubr.f32.mxu0 0.0
  %121 = vmatmul.mubr.f32.gmra.mxu0 %v33
  %v122 = vpop.f32.mrf.mxu0
  %v123 = vadd.f32 %v29, %v122
  %v124 = vpop.f32.mrf.mxu0
  %125 = vmatprep.mubr.f32.mxu0 0.0
  %126 = vmatmul.mubr.f32.gmra.mxu0 %v36
  %v127 = vpop.f32.mrf.mxu0
  %v128 = vadd.f32 %v29, %v127
  %v129 = vpop.f32.mrf.mxu0
  %130 = vmatprep.mubr.f32.mxu0 0.0
  %131 = vmatmul.mubr.f32.gmra.mxu0 %v39
  %v132 = vpop.f32.mrf.mxu0
  %v133 = vadd.f32 %v29, %v132
  %v134 = vpop.f32.mrf.mxu0
  %135 = vmatprep.mubr.f32.mxu0 0.0
  %136 = vmatmul.mubr.f32.gmra.mxu0 %v42
  %v137 = vpop.f32.mrf.mxu0
  %v138 = vadd.f32 %v29, %v137
  %v139 = vpop.f32.mrf.mxu0
  %140 = vmatprep.mubr.f32.mxu0 0.0
  %141 = vmatmul.mubr.f32.gmra.mxu0 %v45
  %v142 = vpop.f32.mrf.mxu0
  %v143 = vadd.f32 %v29, %v142
  %v144 = vpop.f32.mrf.mxu0
  %145 = vmatprep.mubr.f32.mxu0 0.0
  %146 = vmatmul.mubr.f32.gmra.mxu0 %v48
  %v147 = vpop.f32.mrf.mxu0
  %v148 = vadd.f32 %v29, %v147
  %v149 = vpop.f32.mrf.mxu0
  %150 = vmatprep.mubr.f32.mxu0 0.0
  %151 = vmatmul.mubr.f32.gmra.mxu0 %v51
  %v152 = vpop.f32.mrf.mxu0
  %v153 = vadd.f32 %v29, %v152
  %v154 = vpop.f32.mrf.mxu0
  %155 = vmatprep.mubr.f32.mxu0 0.0
  %156 = vmatmul.mubr.f32.gmra.mxu0 %v54
  %v157 = vpop.f32.mrf.mxu0
  %v158 = vadd.f32 %v29, %v157
  %v159 = vpop.f32.mrf.mxu0
  %160 = vdwg.mxu0
  %v161 = vmax.f32 %v123, 0.0
  %v162 = vmax.f32 %v128, 0.0
  %v163 = vmax.f32 %v133, 0.0
  %v164 = vmax.f32 %v138, 0.0
  %v165 = vmax.f32 %v143, 0.0
  %v166 = vmax.f32 %v148, 0.0
  %v167 = vmax.f32 %v153, 0.0
  %v168 = vmax.f32 %v158, 0.0
  %169 = vst [vmem:[%s3] sm:$0xff] %v161
  %170 = vst [vmem:[%s3 + $0x8] sm:$0xff] %v162
  %171 = vst [vmem:[%s3 + $0x10] sm:$0xff] %v163
  %172 = vst [vmem:[%s3 + $0x18] sm:$0xff] %v164
  %173 = vst [vmem:[%s3 + $0x20] sm:$0xff] %v165
  %174 = vst [vmem:[%s3 + $0x28] sm:$0xff] %v166
  %175 = vst [vmem:[%s3 + $0x30] sm:$0xff] %v167
  %176 = vst [vmem:[%s3 + $0x38] sm:$0xff] %v168
  // Predicated region
  $region14: #{conv2d_forward.3} parent=0 // pred_check
    _
  $region15: #{conv2d_forward.3} parent=0 // pred_check_branch
    %178 = sbr.rel (0) target = $region17
  $region16: #{conv2d_forward.3} parent=0 // pred_region
    _
  $region17: #{conv2d_forward.3} parent=0 // pred_fallthru
    _
  // Predicated region
  $region18: #{conv2d_forward.3} parent=0 // pred_check
    _
  $region19: #{conv2d_forward.3} parent=0 // pred_check_branch
    %180 = sbr.rel (0) target = $region21
  $region20: #{conv2d_forward.3} parent=0 // pred_region
    _
  $region21: #{conv2d_forward.3} parent=0 // pred_fallthru
    _

</llo_original>
